<compile_context>
chip_gen: v6e
topology: v6e:2x2x1
jax: 0.10.0
libtpu: 0.0.40
codegen_flags: <defaults>
</compile_context>

<pallas_src>
import math

import jax
import jax.numpy as jnp
from jax.experimental import pallas as pl
from jax.experimental.pallas import tpu as pltpu


def _make_pos_enc(d_model: int, max_seq_len: int = 20) -> jnp.ndarray:
    """Deterministic sinusoidal positional-encoding table, shape (1, max_seq_len, d_model)."""
    pos = jnp.arange(max_seq_len, dtype=jnp.float32)[:, None]                  # (L, 1)
    div_term = jnp.exp(
        jnp.arange(0, d_model, 2, dtype=jnp.float32) * (-math.log(10000.0) / d_model)
    )                                                                          # (ceil(D/2),)
    pe = jnp.zeros((max_seq_len, d_model), dtype=jnp.float32)
    pe = pe.at[:, 0::2].set(jnp.sin(pos * div_term))
    pe = pe.at[:, 1::2].set(jnp.cos(pos * div_term[: d_model // 2]))           # odd-D safe
    return pe[None, :, :]                                                      # (1, L, D)


def _add_pe_kernel(x_ref, pe_ref, o_ref):
    # Broadcast add (leading dim 1 of PE broadcasts over the batch tile) — pure VPU,
    # memory-bound.
    o_ref[...] = x_ref[...] + pe_ref[...]


def _round_up(x: int, m: int) -> int:
    return ((x + m - 1) // m) * m


def _sublane(dtype) -> int:
    # Sublane granularity in *elements*: 8 for 4-byte, 16 for 2-byte, 32 for 1-byte
    # (packed dtypes pack along sublanes).
    return 8 * max(1, 4 // jnp.dtype(dtype).itemsize)


def _target_block_bytes() -> int:
    """Per-block byte budget for the x / out tiles."""
    try:
        kind = jax.devices()[0].device_kind.lower()
    except Exception:
        kind = ""
    if "v5 lite" in kind or "v5e" in kind or "v5litepod" in kind:
        # v5e: ~820 GB/s HBM; a 2 MiB block already makes the 0.35 us/step overhead <10%.
        return 2 * 1024 * 1024
    # v6e / v7x: larger blocks needed to reach the HBM roofline plateau.
    return 4 * 1024 * 1024


def _choose_tiles_3d(B: int, S: int, D: int, itemsize: int, target: int, sub: int):
    """Tiles for a (b_tile, s_tile, D) block.  Last dim is the full D (always legal);
    s_tile is a multiple of `sub` or the full S.  Budget counts padded VMEM bytes."""
    row_bytes = _round_up(D, 128) * itemsize            # one (b, s) slot, lane-padded
    if B * _round_up(S, sub) * row_bytes <= target:
        return B, S                                     # whole array in one block
    # Prefer full-B blocks with S tiled (PE reused across all B inside one block).
    s_tile = (target // (B * row_bytes)) // sub * sub
    if s_tile >= sub:
        return B, min(s_tile, S)
    # Very large B: tile B as well, keep a minimal sublane-aligned S tile.
    s_tile = min(S, sub)
    b_tile = max(1, min(B, target // (_round_up(s_tile, sub) * row_bytes)))
    return b_tile, s_tile


def _choose_tiles_flat(B: int, total: int, itemsize: int, target: int, sub: int):
    """Tiles for a (b_tile, chunk) block of the (B, S*D) flattened view.  chunk is a
    multiple of 128 (or the full trailing dim); b_tile a multiple of `sub` or B.
    Budget counts sublane/lane padding."""
    if _round_up(B, sub) * _round_up(total, 128) * itemsize <= target:
        return B, total                                 # whole array in one block
    # Full-B blocks with a wide lane-dense chunk if that keeps chunk >= 512 lanes.
    chunk = (target // (_round_up(B, sub) * itemsize)) // 128 * 128
    if chunk >= 512:
        return B, min(chunk, total)
    # Large B: keep chunk >= 512 lanes and tile B instead (multiple of the sublane).
    chunk = min(total, 512)
    b_tile = (target // (_round_up(chunk, 128) * itemsize)) // sub * sub
    b_tile = max(sub, min(B, b_tile))
    return b_tile, chunk


def positional_encoding(x: jnp.ndarray, pos_enc: jnp.ndarray) -> jnp.ndarray:
    """x: (B, S, D); pos_enc: (1, max_seq_len, D).  Returns x + pos_enc[:, :S, :]."""
    B, S, D = x.shape
    max_seq_len = pos_enc.shape[1]
    assert S <= max_seq_len, f"sequence length {S} exceeds max_seq_len {max_seq_len}"
    assert pos_enc.shape[2] == D, "d_model mismatch between x and pos_enc"

    itemsize = jnp.dtype(x.dtype).itemsize
    sub = _sublane(x.dtype)
    target = _target_block_bytes()

    pe = pos_enc[:, :S, :].astype(x.dtype)              # (1, S, D), tiny table slice

    cost = pl.CostEstimate(
        flops=B * S * D,
        transcendentals=0,
        bytes_accessed=(2 * B * S * D + S * D) * itemsize,
    )
    cparams = dict(vmem_limit_bytes=32 * 1024 * 1024)

    fits_whole = B * _round_up(S, sub) * _round_up(D, 128) * itemsize <= target
    use_3d = (D % 128 == 0) or (B < sub) or fits_whole

    if use_3d:
        # ---- 3-D path: no reshape, no HBM relayout; D stays the lane dim. ----
        b_tile, s_tile = _choose_tiles_3d(B, S, D, itemsize, target, sub)
        grid = (pl.cdiv(S, s_tile), pl.cdiv(B, b_tile))  # B innermost -> PE reused
        out = pl.pallas_call(
            _add_pe_kernel,
            out_shape=jax.ShapeDtypeStruct((B, S, D), x.dtype),
            grid_spec=pltpu.PrefetchScalarGridSpec(
                num_scalar_prefetch=0,
                grid=grid,
                in_specs=[
                    pl.BlockSpec((b_tile, s_tile, D), lambda s, b: (b, s, 0)),
                    # PE block index depends only on the S axis -> one DMA per S-tile.
                    pl.BlockSpec((1, s_tile, D), lambda s, b: (0, s, 0)),
                ],
                out_specs=pl.BlockSpec((b_tile, s_tile, D), lambda s, b: (b, s, 0)),
            ),
            compiler_params=pltpu.CompilerParams(
                dimension_semantics=("parallel", "parallel"), **cparams),
            input_output_aliases={0: 0},                 # in-place add on x's buffer
            cost_estimate=cost,
        )(x, pe)
        return out

    # ---- Flat path: D % 128 != 0 and B >= sublane: flatten (S, D) -> S*D so the ----
    # ---- trailing dim is lane-dense (unmasked vst); worth one relayout here.    ----
    total = S * D
    x2 = x.reshape(B, total)
    pe2 = pe.reshape(1, total)
    b_tile, chunk = _choose_tiles_flat(B, total, itemsize, target, sub)
    grid = (pl.cdiv(total, chunk), pl.cdiv(B, b_tile))   # B innermost -> PE reused
    out2 = pl.pallas_call(
        _add_pe_kernel,
        out_shape=jax.ShapeDtypeStruct((B, total), x.dtype),
        grid_spec=pltpu.PrefetchScalarGridSpec(
            num_scalar_prefetch=0,
            grid=grid,
            in_specs=[
                pl.BlockSpec((b_tile, chunk), lambda c, b: (b, c)),
                # Shared PE chunk; block index constant across B-tiles -> one DMA/chunk.
                pl.BlockSpec((1, chunk), lambda c, b: (0, c)),
            ],
            out_specs=pl.BlockSpec((b_tile, chunk), lambda c, b: (b, c)),
        ),
        compiler_params=pltpu.CompilerParams(
            dimension_semantics=("parallel", "parallel"), **cparams),
        input_output_aliases={0: 0},                     # in-place add on x's buffer
        cost_estimate=cost,
    )(x2, pe2)
    return out2.reshape(B, S, D)


if __name__ == "__main__":
    B, S, D = 2, 8, 32
    max_seq_len = 20

    key = jax.random.PRNGKey(0)
    x = jax.random.normal(key, (B, S, D), dtype=jnp.float32)

    pos_enc = _make_pos_enc(D, max_seq_len)

    # Plain-JAX reference (computed before the kernel call).
    ref = x + pos_enc[:, :S, :].astype(x.dtype)

    out = jax.block_until_ready(positional_encoding(x, pos_enc))

    assert out.shape == (B, S, D)
    assert jnp.allclose(out, ref, atol=1e-6, rtol=1e-6)

    print("KERNEL_OK")
</pallas_src>

<mosaic_0001>
module attributes {stable_mosaic.version = 11 : i64} {
  func.func @_add_pe_kernel(%arg0: i32, %arg1: i32, %arg2: memref<2x8x32xf32, #tpu.memory_space<vmem>>, %arg3: memref<1x8x32xf32, #tpu.memory_space<vmem>>, %arg4: memref<2x8x32xf32, #tpu.memory_space<vmem>>) attributes {dimension_semantics = [#tpu.dimension_semantics<parallel>, #tpu.dimension_semantics<parallel>], iteration_bounds = array<i64: 1, 1>, scalar_prefetch = 0 : i64, scratch_operands = 0 : i64, tpu.core_type = #tpu.core_type<tc>, window_params = [{transform_indices = @transform_0, window_bounds = array<i64: 2, 8, 32>}, {transform_indices = @transform_1, window_bounds = array<i64: 1, 8, 32>}, {transform_indices = @transform_2, window_bounds = array<i64: 2, 8, 32>}]} {
    %c0 = arith.constant 0 : index
    %c0_0 = arith.constant 0 : index
    %c0_1 = arith.constant 0 : index
    %0 = vector.load %arg2[%c0, %c0_0, %c0_1] : memref<2x8x32xf32, #tpu.memory_space<vmem>>, vector<2x8x32xf32>
    %c0_2 = arith.constant 0 : index
    %c0_3 = arith.constant 0 : index
    %c0_4 = arith.constant 0 : index
    %1 = vector.load %arg3[%c0_2, %c0_3, %c0_4] : memref<1x8x32xf32, #tpu.memory_space<vmem>>, vector<1x8x32xf32>
    %2 = vector.broadcast %1 : vector<1x8x32xf32> to vector<2x8x32xf32>
    %3 = arith.addf %0, %2 : vector<2x8x32xf32>
    %c0_5 = arith.constant 0 : index
    %c0_6 = arith.constant 0 : index
    %c0_7 = arith.constant 0 : index
    %4 = vector.load %arg4[%c0_5, %c0_6, %c0_7] : memref<2x8x32xf32, #tpu.memory_space<vmem>>, vector<2x8x32xf32>
    tpu.vector_store %arg4[%c0_5, %c0_6, %c0_7], %3 {strides = array<i32>} : memref<2x8x32xf32, #tpu.memory_space<vmem>>, vector<2x8x32xf32>,
    return
  }
  func.func @transform_0(%arg0: i32, %arg1: i32) -> (i32, i32, i32) {
    %c0_i32 = arith.constant 0 : i32
    %c0_i32_0 = arith.constant 0 : i32
    return %arg1, %arg0, %c0_i32 : i32, i32, i32
  }
  func.func @transform_1(%arg0: i32, %arg1: i32) -> (i32, i32, i32) {
    %c0_i32 = arith.constant 0 : i32
    %c0_i32_0 = arith.constant 0 : i32
    %c0_i32_1 = arith.constant 0 : i32
    return %c0_i32, %arg0, %c0_i32_0 : i32, i32, i32
  }
  func.func @transform_2(%arg0: i32, %arg1: i32) -> (i32, i32, i32) {
    %c0_i32 = arith.constant 0 : i32
    %c0_i32_0 = arith.constant 0 : i32
    return %arg1, %arg0, %c0_i32 : i32, i32, i32
  }
}

</mosaic_0001>

<llo_original>
// kernel: tpu_custom_call.1
$region0: #{tpu_custom_call.1}
  #allocation0 [shape = 'u32[]', space=smem, size = 0x4, offset = 0x4, fixed_abs, tag = 'smem constant byte address 0x4 - core index']
  #allocation1 [shape = 'u32[144,128]{1,0:T(1,128)}', space=vmem, size = 0x12000, scoped, tag = 'internal scratch']
  %s0 = inlined_call_operand.hbm [shape: f32[2,8,32], index: 0, kind: input, shape index: {}, may-alias: {0,2}]
  %s1 = inlined_call_operand.vmem [shape: f32[1,8,32], index: 1, kind: input, shape index: {}]
  %s2 = inlined_call_operand.hbm [shape: f32[2,8,32], index: 2, kind: output, shape index: {}, may-alias: {0,2}]
  %s3 = sld [smem:[#allocation0]]
  $region22: #{tpu_custom_call.1} parent=0
    _
  %s5 = ssub.s32 1, %s3
  %s6 = scalar_select 0, %s5, %s3
  $region1: #{tpu_custom_call.1} parent=0
    #allocation2 [shape = 'u8[8192]{0}', space=vmem, size = 0x2000, scoped, tag = 'input window, operand 0, single buffered']
    #allocation3 [shape = 's32[1]{0}', space=sflag, size = 0x4, scoped, tag = 'scoped memory for tpu_custom_call.1']
    #allocation4 [shape = 's32[1]{0}', space=sflag, size = 0x4, scoped, tag = 'scoped memory for tpu_custom_call.1']
    #allocation5 [shape = 'u8[8192]{0}', space=vmem, size = 0x2000, scoped, tag = 'output window, operand 0, single buffered']
    %7 = vsyncpa [#allocation3], 0
    %8 = vsyncpa [#allocation4], 0
    // Predicated region
    $region2: #{tpu_custom_call.1} parent=1 // pred_check
      _
    $region3: #{tpu_custom_call.1} parent=1 // pred_check_branch
      %10 = sbr.rel (0) target = $region5
    $region4: #{tpu_custom_call.1} parent=1 // pred_region
      %s12 = ssub.s32 256, 256
      %13 = vsyncadd [#allocation3], %s12
      %s14 = sshll.u32 [#allocation2], 4
      %s15 = int_to_ptr.vmem [resolvable:$true] %s14
      %20 = dma.hbm_to_vmem [thread:$0]  %s0, 256, %s15, [#allocation3], 128, 128, 8
    $region5: #{tpu_custom_call.1} parent=1 // pred_fallthru
      _
    // Predicated region
    $region6: #{tpu_custom_call.1} parent=1 // pred_check
      _
    $region7: #{tpu_custom_call.1} parent=1 // pred_check_branch
      %22 = sbr.rel (0) target = $region9
    $region8: #{tpu_custom_call.1} parent=1 // pred_region
      _
    $region9: #{tpu_custom_call.1} parent=1 // pred_fallthru
      _
    // Predicated region
    $region10: #{tpu_custom_call.1} parent=1 // pred_check
      _
    $region11: #{tpu_custom_call.1} parent=1 // pred_check_branch
      %24 = sbr.rel (0) target = $region13
    $region12: #{tpu_custom_call.1} parent=1 // pred_region
      %25 = dma.done [#allocation3], 256
    $region13: #{tpu_custom_call.1} parent=1 // pred_fallthru
      _
    %v26 = vld [vmem:[#allocation2] sm:$0xff]
    %v27 = vld [vmem:[#allocation2 + $0x8] sm:$0xff]
    %v28 = vld [vmem:[%s1] sm:$0xff]
    %v29 = vadd.f32 %v26, %v28
    %v30 = vadd.f32 %v27, %v28
    %vm31 = vcmask 261120
    %32 = vst.msk [vmem:[#allocation5] sm:$0xff] %vm31, %v29
    %33 = vst.msk [vmem:[#allocation5 + $0x8] sm:$0xff] %vm31, %v30
    // Predicated region
    $region14: #{tpu_custom_call.1} parent=1 // pred_check
      _
    $region15: #{tpu_custom_call.1} parent=1 // pred_check_branch
      %35 = sbr.rel (0) target = $region17
    $region16: #{tpu_custom_call.1} parent=1 // pred_region
      %s37 = ssub.s32 256, 256
      %38 = vsyncadd [#allocation4], %s37
      %s39 = sshll.u32 [#allocation5], 4
      %s40 = int_to_ptr.vmem [resolvable:$true] %s39
      %45 = dma.vmem_to_hbm [thread:$0]  %s40, 256, %s2, [#allocation4], 128, 128, 8
    $region17: #{tpu_custom_call.1} parent=1 // pred_fallthru
      _
    // Predicated region
    $region18: #{tpu_custom_call.1} parent=1 // pred_check
      _
    $region19: #{tpu_custom_call.1} parent=1 // pred_check_branch
      %47 = sbr.rel (0) target = $region21
    $region20: #{tpu_custom_call.1} parent=1 // pred_region
      %48 = dma.done [#allocation4], 256
    $region21: #{tpu_custom_call.1} parent=1 // pred_fallthru
      _
    %49 = vsyncpa [#allocation3], 1
    %50 = vsyncpa [#allocation4], 1

</llo_original>
